<compile_context>
chip_gen: v7x
topology: tpu7x:2x2x1
jax: 0.10.0
libtpu: 0.0.40
codegen_flags: <defaults>
</compile_context>

<pallas_src>
import math
import functools

import jax
import jax.numpy as jnp
from jax import lax
from jax.experimental import pallas as pl
from jax.experimental.pallas import tpu as pltpu


# ---------------------------------------------------------------------------
# Kernel 1: per-head fused QKV projection.
# ---------------------------------------------------------------------------
def _qkv_proj_kernel(x_ref, wqkv_ref, bqkv_ref, q_ref, k_ref, v_ref, *, d_head):
    """x_ref: (1, T, C) f32; wqkv_ref: (1, C, 3D) bf16 (q-slice pre-scaled);
    bqkv_ref: (1, 1, 3D) f32; q/k/v_ref: (1, 1, T, D) bf16 outputs."""
    # Cast activations in-kernel (VPU) instead of a wrapper-side cast that would
    # cost an extra full HBM read+write pass over x.
    x = x_ref[0].astype(jnp.bfloat16)                                  # (T, C)
    qkv = jnp.dot(x, wqkv_ref[0], preferred_element_type=jnp.float32)  # (T, 3D)
    qkv = qkv + bqkv_ref[0, 0]
    q_ref[0, 0] = qkv[:, 0 * d_head:1 * d_head].astype(q_ref.dtype)
    k_ref[0, 0] = qkv[:, 1 * d_head:2 * d_head].astype(k_ref.dtype)
    v_ref[0, 0] = qkv[:, 2 * d_head:3 * d_head].astype(v_ref.dtype)


# ---------------------------------------------------------------------------
# Kernel 2: flash attention (online softmax over KV tiles) + fused output proj.
# ---------------------------------------------------------------------------
def _flash_attn_proj_kernel(q_ref, k_ref, v_ref, wp_ref, bp_ref, o_ref,
                            m_sc, l_sc, acc_sc, out_sc,
                            *, block_q, block_k, approx_recip):
    """q_ref: (1,1,tq,D) bf16 (scale pre-folded); k/v_ref: (1,1,tk,D) bf16;
    wp_ref: (1,D,C) bf16; bp_ref: (1,C) f32; o_ref: (1,tq,C) out dtype.
    Scratch: m/l (tq,1) f32, acc (tq,D) f32, out (tq,C) f32."""
    qi = pl.program_id(1)
    h = pl.program_id(2)
    kv = pl.program_id(3)
    n_heads = pl.num_programs(2)
    n_kv = pl.num_programs(3)

    # New (batch, q-tile) slab: zero the fused output-projection accumulator.
    @pl.when(jnp.logical_and(h == 0, kv == 0))
    def _():
        out_sc[...] = jnp.zeros_like(out_sc)

    # New head: reset the online-softmax state.
    @pl.when(kv == 0)
    def _():
        m_sc[...] = jnp.full_like(m_sc, -jnp.inf)
        l_sc[...] = jnp.zeros_like(l_sc)
        acc_sc[...] = jnp.zeros_like(acc_sc)

    # Causal block skipping: KV tiles entirely above the diagonal contribute nothing
    # (their index_map also aliases the resident diagonal tile, so no DMA either).
    @pl.when(kv * block_k <= qi * block_q + (block_q - 1))
    def _():
        q = q_ref[0, 0]                       # (tq, D) bf16
        k = k_ref[0, 0]                       # (tk, D) bf16
        v = v_ref[0, 0]                       # (tk, D) bf16
        # Scores for this (q-tile, kv-tile): contract on D, f32 accumulation.
        s = lax.dot_general(q, k, (((1,), (1,)), ((), ())),
                            preferred_element_type=jnp.float32)        # (tq, tk)
        # Element-level causal mask (only the diagonal-crossing block actually
        # needs it, but the VPU compare/select is cheap).  Rows always keep at
        # least the diagonal entry, so no fully-masked-row NaN can occur.
        row = qi * block_q + lax.broadcasted_iota(jnp.int32, (block_q, block_k), 0)
        col = kv * block_k + lax.broadcasted_iota(jnp.int32, (block_q, block_k), 1)
        s = jnp.where(col <= row, s, -jnp.inf)

        m_prev = m_sc[...]
        m_new = jnp.maximum(m_prev, jnp.max(s, axis=-1, keepdims=True))
        alpha = jnp.exp(m_prev - m_new)
        p = jnp.exp(s - m_new)
        l_sc[...] = alpha * l_sc[...] + jnp.sum(p, axis=-1, keepdims=True)
        acc_sc[...] = alpha * acc_sc[...] + jnp.dot(
            p.astype(jnp.bfloat16), v, preferred_element_type=jnp.float32)
        m_sc[...] = m_new

    # Last KV tile of this head: normalize and fold this head's slice of the
    # output projection into the (tq, C) accumulator: out += y_h @ Wp_h.
    @pl.when(kv == n_kv - 1)
    def _():
        y_h = acc_sc[...] * pl.reciprocal(l_sc[...], approx=approx_recip)
        out_sc[...] += jnp.dot(y_h.astype(jnp.bfloat16), wp_ref[0],
                               preferred_element_type=jnp.float32)

    # Last head + last KV tile: add bias and emit the lane-dense output block once.
    @pl.when(jnp.logical_and(h == n_heads - 1, kv == n_kv - 1))
    def _():
        o_ref[0] = (out_sc[...] + bp_ref[0]).astype(o_ref.dtype)


# ---------------------------------------------------------------------------
# Wrapper
# ---------------------------------------------------------------------------
def _default_block(t):
    for cand in (512, 256, 128):
        if t % cand == 0:
            return cand
    return t


def causal_self_attention(x, params, n_head, *, block_q=None, block_k=None,
                          out_dtype=jnp.bfloat16, approx_recip=True):
    """x: (B, T, C) float32.  params: dict of (wq,bq,wk,bk,wv,bv,wp,bp) in PyTorch
    (out_features, in_features) layout.  Returns (B, T, C) in `out_dtype`
    (bf16 by default to halve output HBM writeback)."""
    B, T, C = x.shape
    H = n_head
    assert C % H == 0
    D = C // H
    scale = 1.0 / math.sqrt(D)

    block_q = _default_block(T) if block_q is None else block_q
    block_k = _default_block(T) if block_k is None else block_k
    assert T % block_q == 0 and T % block_k == 0, "T must be divisible by the tile sizes"
    n_q, n_kv = T // block_q, T // block_k

    # --- one-time parameter prep (would live at model-init time in practice) ---
    # Per-head fused QKV weight in (in, out) layout: (H, C, 3D), q-slice pre-scaled.
    def per_head_in_out(w):           # w: (C_out, C_in) torch layout -> (C_in, H, D)
        return w.T.reshape(C, H, D)

    w_qkv = jnp.concatenate(
        [per_head_in_out(params["wq"] * scale),
         per_head_in_out(params["wk"]),
         per_head_in_out(params["wv"])], axis=-1)                    # (C, H, 3D)
    w_qkv = jnp.transpose(w_qkv, (1, 0, 2)).astype(jnp.bfloat16)     # (H, C, 3D)
    b_qkv = jnp.concatenate(
        [(params["bq"] * scale).reshape(H, 1, D),
         params["bk"].reshape(H, 1, D),
         params["bv"].reshape(H, 1, D)], axis=-1).astype(jnp.float32)  # (H, 1, 3D)
    w_p = params["wp"].T.reshape(H, D, C).astype(jnp.bfloat16)       # (H, D, C)
    b_p = params["bp"].reshape(1, C).astype(jnp.float32)

    # --- Kernel 1: per-head QKV projection ---------------------------------
    q, k, v = pl.pallas_call(
        functools.partial(_qkv_proj_kernel, d_head=D),
        out_shape=(
            jax.ShapeDtypeStruct((B, H, T, D), jnp.bfloat16),
            jax.ShapeDtypeStruct((B, H, T, D), jnp.bfloat16),
            jax.ShapeDtypeStruct((B, H, T, D), jnp.bfloat16),
        ),
        grid_spec=pltpu.PrefetchScalarGridSpec(
            num_scalar_prefetch=0,
            grid=(B, H),
            in_specs=[
                pl.BlockSpec((1, T, C), lambda b, h: (b, 0, 0)),        # x (resident per b)
                pl.BlockSpec((1, C, 3 * D), lambda b, h: (h, 0, 0)),    # Wqkv_h
                pl.BlockSpec((1, 1, 3 * D), lambda b, h: (h, 0, 0)),    # bqkv_h
            ],
            out_specs=[
                pl.BlockSpec((1, 1, T, D), lambda b, h: (b, h, 0, 0)),  # q
                pl.BlockSpec((1, 1, T, D), lambda b, h: (b, h, 0, 0)),  # k
                pl.BlockSpec((1, 1, T, D), lambda b, h: (b, h, 0, 0)),  # v
            ],
        ),
        compiler_params=pltpu.CompilerParams(
            dimension_semantics=("parallel", "parallel"),
            vmem_limit_bytes=32 * 1024 * 1024,
        ),
    )(x, w_qkv, b_qkv)

    # --- Kernel 2: flash attention + fused output projection ---------------
    def kv_index(b, qi, h, kv):
        # Alias fully-masked (skipped) KV tiles onto the last tile that actually
        # intersects this q-tile, so Pallas detects an unchanged block index and
        # skips the DMA for skipped steps.
        last = (qi * block_q + block_q - 1) // block_k
        return (b, h, jnp.minimum(kv, last), 0)

    out = pl.pallas_call(
        functools.partial(_flash_attn_proj_kernel, block_q=block_q,
                          block_k=block_k, approx_recip=approx_recip),
        out_shape=jax.ShapeDtypeStruct((B, T, C), out_dtype),
        grid_spec=pltpu.PrefetchScalarGridSpec(
            num_scalar_prefetch=0,
            grid=(B, n_q, H, n_kv),
            in_specs=[
                pl.BlockSpec((1, 1, block_q, D),
                             lambda b, qi, h, kv: (b, h, qi, 0)),       # q tile
                pl.BlockSpec((1, 1, block_k, D), kv_index),             # k tile
                pl.BlockSpec((1, 1, block_k, D), kv_index),             # v tile
                pl.BlockSpec((1, D, C), lambda b, qi, h, kv: (h, 0, 0)),  # Wp_h
                pl.BlockSpec((1, C), lambda b, qi, h, kv: (0, 0)),        # bp
            ],
            out_specs=pl.BlockSpec((1, block_q, C),
                                   lambda b, qi, h, kv: (b, qi, 0)),
            scratch_shapes=[
                pltpu.VMEM((block_q, 1), jnp.float32),   # m (running max)
                pltpu.VMEM((block_q, 1), jnp.float32),   # l (running denom)
                pltpu.VMEM((block_q, D), jnp.float32),   # acc (unnormalized y_h)
                pltpu.VMEM((block_q, C), jnp.float32),   # fused out-proj accumulator
            ],
        ),
        compiler_params=pltpu.CompilerParams(
            # B and Tq-tiles are independent (megacore-shardable); H and KV are
            # reduction axes for the output-projection / online-softmax accumulators.
            dimension_semantics=("parallel", "parallel", "arbitrary", "arbitrary"),
            # Working set is O(tiles) — comfortably under v7x's 64 MiB; raise tiles
            # (and this limit) on v6e's 128 MiB VMEM for fewer grid steps.
            vmem_limit_bytes=32 * 1024 * 1024,
        ),
    )(q, k, v, w_p, b_p)
    return out


# ---------------------------------------------------------------------------
# Pure-JAX f32 reference matching the PyTorch forward (eval mode).
# ---------------------------------------------------------------------------
def reference_attention(x, params, n_head):
    B, T, C = x.shape
    D = C // n_head

    def lin(t, w, b):
        return t @ w.T + b

    q = lin(x, params["wq"], params["bq"]).reshape(B, T, n_head, D).transpose(0, 2, 1, 3)
    k = lin(x, params["wk"], params["bk"]).reshape(B, T, n_head, D).transpose(0, 2, 1, 3)
    v = lin(x, params["wv"], params["bv"]).reshape(B, T, n_head, D).transpose(0, 2, 1, 3)

    att = jnp.einsum("bhtd,bhsd->bhts", q, k) * (1.0 / math.sqrt(D))
    mask = jnp.tril(jnp.ones((T, T), dtype=bool))
    att = jnp.where(mask[None, None], att, -jnp.inf)
    att = jax.nn.softmax(att, axis=-1)
    y = jnp.einsum("bhts,bhsd->bhtd", att, v)
    y = y.transpose(0, 2, 1, 3).reshape(B, T, C)
    return lin(y, params["wp"], params["bp"])


def init_params(key, n_embd):
    """Deterministic PyTorch-like uniform(-1/sqrt(C), 1/sqrt(C)) init."""
    bound = 1.0 / math.sqrt(n_embd)
    names = ["wq", "bq", "wk", "bk", "wv", "bv", "wp", "bp"]
    shapes = [(n_embd, n_embd), (n_embd,)] * 4
    keys = jax.random.split(key, len(names))
    return {
        n: jax.random.uniform(k, s, jnp.float32, minval=-bound, maxval=bound)
        for n, s, k in zip(names, shapes, keys)
    }


if __name__ == "__main__":
    # config: n_embd=32, n_head=4, block_size >= T, attn_pdrop=resid_pdrop=0 (eval).
    # NOTE: toy demo shape — C=32 leaves most MXU lanes masked; tune at GPT-2-ish
    # shapes (T=1024, C=768) where the tiling above actually matters.
    B, T, C, H = 2, 32, 32, 4

    key = jax.random.PRNGKey(0)
    k_x, k_p = jax.random.split(key)
    x = jax.random.normal(k_x, (B, T, C), dtype=jnp.float32)
    params = init_params(k_p, C)

    # block_q = block_k = 16 -> 2 q-tiles x 2 kv-tiles: exercises the online-softmax
    # accumulation, the causal block skip (q-tile 0 / kv-tile 1), and the diagonal mask.
    out = causal_self_attention(x, params, n_head=H, block_q=16, block_k=16)
    out = jax.block_until_ready(out)

    ref = reference_attention(x, params, n_head=H)
    assert out.shape == (B, T, C)
    # bf16-fed MXU matmuls, bf16 q/k/v/output and EUP approximate reciprocal =>
    # looser tolerance than pure f32.
    assert jnp.allclose(out.astype(jnp.float32), ref, atol=5e-2, rtol=5e-2), \
        "mismatch vs reference"

    print("KERNEL_OK")
</pallas_src>

<mosaic_0001>
module attributes {stable_mosaic.version = 11 : i64} {
  func.func @_qkv_proj_kernel(%arg0: i32, %arg1: i32, %arg2: memref<1x32x32xf32, #tpu.memory_space<vmem>>, %arg3: memref<1x32x24xbf16, #tpu.memory_space<vmem>>, %arg4: memref<1x1x24xf32, #tpu.memory_space<vmem>>, %arg5: memref<1x1x32x8xbf16, #tpu.memory_space<vmem>>, %arg6: memref<1x1x32x8xbf16, #tpu.memory_space<vmem>>, %arg7: memref<1x1x32x8xbf16, #tpu.memory_space<vmem>>) attributes {dimension_semantics = [#tpu.dimension_semantics<parallel>, #tpu.dimension_semantics<parallel>], iteration_bounds = array<i64: 2, 4>, scalar_prefetch = 0 : i64, scratch_operands = 0 : i64, tpu.core_type = #tpu.core_type<tc>, window_params = [{transform_indices = @transform_0, window_bounds = array<i64: 1, 32, 32>}, {transform_indices = @transform_1, window_bounds = array<i64: 1, 32, 24>}, {transform_indices = @transform_2, window_bounds = array<i64: 1, 1, 24>}, {transform_indices = @transform_3, window_bounds = array<i64: 1, 1, 32, 8>}, {transform_indices = @transform_4, window_bounds = array<i64: 1, 1, 32, 8>}, {transform_indices = @transform_5, window_bounds = array<i64: 1, 1, 32, 8>}]} {
    %c0 = arith.constant 0 : index
    %c0_0 = arith.constant 0 : index
    %c0_1 = arith.constant 0 : index
    %0 = vector.load %arg2[%c0, %c0_0, %c0_1] : memref<1x32x32xf32, #tpu.memory_space<vmem>>, vector<1x32x32xf32>
    %1 = vector.shape_cast %0 : vector<1x32x32xf32> to vector<32x32xf32>
    %2 = arith.truncf %1 : vector<32x32xf32> to vector<32x32xbf16>
    %c0_2 = arith.constant 0 : index
    %c0_3 = arith.constant 0 : index
    %c0_4 = arith.constant 0 : index
    %3 = vector.load %arg3[%c0_2, %c0_3, %c0_4] : memref<1x32x24xbf16, #tpu.memory_space<vmem>>, vector<1x32x24xbf16>
    %4 = vector.shape_cast %3 : vector<1x32x24xbf16> to vector<32x24xbf16>
    %cst = arith.constant dense<0.000000e+00> : vector<32x24xf32>
    %5 = tpu.matmul %2, %4, %cst {dimension_numbers = #tpu.dot_dimension_numbers<[1], [0], [0], [1], [0, 0, 1, 1], [], []>} : vector<32x32xbf16>, vector<32x24xbf16>, vector<32x24xf32> -> vector<32x24xf32>
    %c0_5 = arith.constant 0 : index
    %c0_6 = arith.constant 0 : index
    %c0_7 = arith.constant 0 : index
    %6 = vector.load %arg4[%c0_5, %c0_6, %c0_7] : memref<1x1x24xf32, #tpu.memory_space<vmem>>, vector<1x1x24xf32>
    %7 = vector.shape_cast %6 : vector<1x1x24xf32> to vector<24xf32>
    %8 = vector.shape_cast %7 : vector<24xf32> to vector<1x24xf32>
    %9 = vector.broadcast %8 : vector<1x24xf32> to vector<32x24xf32>
    %10 = arith.addf %5, %9 : vector<32x24xf32>
    %11 = vector.extract_strided_slice %10 {offsets = [0, 0], sizes = [32, 8], strides = [1, 1]} : vector<32x24xf32> to vector<32x8xf32>
    %12 = arith.truncf %11 : vector<32x8xf32> to vector<32x8xbf16>
    %c0_8 = arith.constant 0 : index
    %c0_9 = arith.constant 0 : index
    %c0_10 = arith.constant 0 : index
    %c0_11 = arith.constant 0 : index
    %13 = vector.load %arg5[%c0_8, %c0_9, %c0_10, %c0_11] : memref<1x1x32x8xbf16, #tpu.memory_space<vmem>>, vector<1x1x32x8xbf16>
    %14 = vector.shape_cast %13 : vector<1x1x32x8xbf16> to vector<32x8xbf16>
    %15 = vector.shape_cast %12 : vector<32x8xbf16> to vector<1x1x32x8xbf16>
    tpu.vector_store %arg5[%c0_8, %c0_9, %c0_10, %c0_11], %15 {strides = array<i32>} : memref<1x1x32x8xbf16, #tpu.memory_space<vmem>>, vector<1x1x32x8xbf16>,
    %16 = vector.extract_strided_slice %10 {offsets = [0, 8], sizes = [32, 8], strides = [1, 1]} : vector<32x24xf32> to vector<32x8xf32>
    %17 = arith.truncf %16 : vector<32x8xf32> to vector<32x8xbf16>
    %c0_12 = arith.constant 0 : index
    %c0_13 = arith.constant 0 : index
    %c0_14 = arith.constant 0 : index
    %c0_15 = arith.constant 0 : index
    %18 = vector.load %arg6[%c0_12, %c0_13, %c0_14, %c0_15] : memref<1x1x32x8xbf16, #tpu.memory_space<vmem>>, vector<1x1x32x8xbf16>
    %19 = vector.shape_cast %18 : vector<1x1x32x8xbf16> to vector<32x8xbf16>
    %20 = vector.shape_cast %17 : vector<32x8xbf16> to vector<1x1x32x8xbf16>
    tpu.vector_store %arg6[%c0_12, %c0_13, %c0_14, %c0_15], %20 {strides = array<i32>} : memref<1x1x32x8xbf16, #tpu.memory_space<vmem>>, vector<1x1x32x8xbf16>,
    %21 = vector.extract_strided_slice %10 {offsets = [0, 16], sizes = [32, 8], strides = [1, 1]} : vector<32x24xf32> to vector<32x8xf32>
    %22 = arith.truncf %21 : vector<32x8xf32> to vector<32x8xbf16>
    %c0_16 = arith.constant 0 : index
    %c0_17 = arith.constant 0 : index
    %c0_18 = arith.constant 0 : index
    %c0_19 = arith.constant 0 : index
    %23 = vector.load %arg7[%c0_16, %c0_17, %c0_18, %c0_19] : memref<1x1x32x8xbf16, #tpu.memory_space<vmem>>, vector<1x1x32x8xbf16>
    %24 = vector.shape_cast %23 : vector<1x1x32x8xbf16> to vector<32x8xbf16>
    %25 = vector.shape_cast %22 : vector<32x8xbf16> to vector<1x1x32x8xbf16>
    tpu.vector_store %arg7[%c0_16, %c0_17, %c0_18, %c0_19], %25 {strides = array<i32>} : memref<1x1x32x8xbf16, #tpu.memory_space<vmem>>, vector<1x1x32x8xbf16>,
    return
  }
  func.func @transform_0(%arg0: i32, %arg1: i32) -> (i32, i32, i32) {
    %c0_i32 = arith.constant 0 : i32
    %c0_i32_0 = arith.constant 0 : i32
    %c0_i32_1 = arith.constant 0 : i32
    return %arg0, %c0_i32, %c0_i32_0 : i32, i32, i32
  }
  func.func @transform_1(%arg0: i32, %arg1: i32) -> (i32, i32, i32) {
    %c0_i32 = arith.constant 0 : i32
    %c0_i32_0 = arith.constant 0 : i32
    %c0_i32_1 = arith.constant 0 : i32
    return %arg1, %c0_i32, %c0_i32_0 : i32, i32, i32
  }
  func.func @transform_2(%arg0: i32, %arg1: i32) -> (i32, i32, i32) {
    %c0_i32 = arith.constant 0 : i32
    %c0_i32_0 = arith.constant 0 : i32
    %c0_i32_1 = arith.constant 0 : i32
    return %arg1, %c0_i32, %c0_i32_0 : i32, i32, i32
  }
  func.func @transform_3(%arg0: i32, %arg1: i32) -> (i32, i32, i32, i32) {
    %c0_i32 = arith.constant 0 : i32
    %c0_i32_0 = arith.constant 0 : i32
    %c0_i32_1 = arith.constant 0 : i32
    return %arg0, %arg1, %c0_i32, %c0_i32_0 : i32, i32, i32, i32
  }
  func.func @transform_4(%arg0: i32, %arg1: i32) -> (i32, i32, i32, i32) {
    %c0_i32 = arith.constant 0 : i32
    %c0_i32_0 = arith.constant 0 : i32
    %c0_i32_1 = arith.constant 0 : i32
    return %arg0, %arg1, %c0_i32, %c0_i32_0 : i32, i32, i32, i32
  }
  func.func @transform_5(%arg0: i32, %arg1: i32) -> (i32, i32, i32, i32) {
    %c0_i32 = arith.constant 0 : i32
    %c0_i32_0 = arith.constant 0 : i32
    %c0_i32_1 = arith.constant 0 : i32
    return %arg0, %arg1, %c0_i32, %c0_i32_0 : i32, i32, i32, i32
  }
}

</mosaic_0001>

<llo_original>
// kernel: tpu_custom_call.1
$region0: #{tpu_custom_call.1}
  #allocation0 [shape = 'u32[]', space=smem, size = 0x4, offset = 0x4, fixed_abs, tag = 'smem constant byte address 0x4 - core index']
  #allocation1 [shape = 'u32[144,128]{1,0:T(1,128)}', space=vmem, size = 0x12000, scoped, tag = 'internal scratch']
  %s0 = inlined_call_operand.vmem [shape: f32[2,32,32], index: 0, kind: input, shape index: {}]
  %s1 = inlined_call_operand.vmem [shape: bf16[4,32,24], index: 1, kind: input, shape index: {}]
  %s2 = inlined_call_operand.vmem [shape: f32[4,1,24], index: 2, kind: input, shape index: {}]
  %s3 = inlined_call_operand.vmem [shape: bf16[2,4,32,8], index: 3, kind: output, shape index: {0}]
  %s4 = inlined_call_operand.vmem [shape: bf16[2,4,32,8], index: 4, kind: output, shape index: {1}]
  %s5 = inlined_call_operand.vmem [shape: bf16[2,4,32,8], index: 5, kind: output, shape index: {2}]
  %6 = xla_tuple %s3, %s4, %s5
  %s7 = sld [smem:[#allocation0]]
  $region61: #{tpu_custom_call.1} parent=0
    _
  %s9 = ssub.s32 1, %s7
  %s10 = scalar_select 0, %s9, %s7
  loop: start=0, step=1, limit=10
  $region2: #{tpu_custom_call.1} parent=0 // loop_pre_header
    _
  $region3: #{tpu_custom_call.1} parent=0 // loop_header
    %s12 = sphi 0, %s16
    %p13 = scmp.ge.s32.totalorder %s12, 10
    %s19 = sphi 0, %s31
    %s20 = sphi 0, %s27
    %s21 = sphi 0, %s19
    %s22 = sphi 0, %s20
    %s23 = sphi 0, %s21
    %s24 = sphi 0, %s22
    %s34 = sphi 0, %s36
    %s37 = sphi 0, %s34
    %s38 = sphi 0, %s37
    %s54 = sphi 0, %s38
    %s60 = sphi 0, %s62
    %s63 = sphi 0, %s60
    %s64 = sphi 0, %s63
    %s80 = sphi 0, %s64
    %s86 = sphi 0, %s88
    %s89 = sphi 0, %s86
    %s90 = sphi 0, %s89
    %s106 = sphi 0, %s90
    %s114 = sphi 0, %s116
    %s117 = sphi 0, %s114
    %s118 = sphi 0, %s117
    %s134 = sphi 0, %s118
    %s142 = sphi 0, %s144
    %s145 = sphi 0, %s142
    %s146 = sphi 0, %s145
    %s162 = sphi 0, %s146
    %s170 = sphi 0, %s172
    %s173 = sphi 0, %s170
    %s174 = sphi 0, %s173
    %s190 = sphi 0, %s174
  $region4: #{tpu_custom_call.1} parent=0 // loop_header_branch
    %15 = sbr.rel (%p13) target = $region8
  $region5: #{tpu_custom_call.1} parent=0 // loop_body
    %s17 = ssub.s32 %s12, 1
    %s18 = ssub.s32 %s12, 2
    %s25 = sadd.s32 1, %s20
    %p26 = scmp.ge.s32.totalorder %s25, 4
    %s27 = scalar_select %p26, 0, %s25
    %s28 = sadd.s32 1, %s19
    %s29 = scalar_select %p26, %s28, %s19
    %p30 = scmp.ge.s32.totalorder %s29, 2
    %s31 = scalar_select %p30, 0, %s29
    %s32 = ssub.s32 %s19, %s31
    %p33 = scmp.eq.s32.totalorder %s32, 0
    %s35 = sadd.s32 %s34, 1
    %s36 = scalar_select %p33, %s34, %s35
    %p39 = pneg %p33
    %p40 = scmp.eq.s32.totalorder %s12, 7
    %p41 = por %p39, %p40
    %p42 = scmp.ne.s32.totalorder %s34, %s37
    %p43 = scmp.eq.s32.totalorder %s12, 0
    %p44 = por %p42, %p43
    %p45 = scmp.ne.s32.totalorder %s34, %s37
    %p46 = scmp.eq.s32.totalorder %s17, 7
    %p47 = por %p45, %p46
    %p48 = scmp.ne.s32.totalorder %s37, %s38
    %p49 = scmp.eq.s32.totalorder %s17, 0
    %p50 = por %p48, %p49
    %p51 = scmp.ne.s32.totalorder %s37, %s38
    %p52 = scmp.eq.s32.totalorder %s18, 7
    %p53 = por %p51, %p52
    %p55 = scmp.ne.s32.totalorder %s38, %s54
    %p56 = scmp.eq.s32.totalorder %s18, 0
    %p57 = por %p55, %p56
    %s58 = ssub.s32 %s20, %s27
    %p59 = scmp.eq.s32.totalorder %s58, 0
    %s61 = sadd.s32 %s60, 1
    %s62 = scalar_select %p59, %s60, %s61
    %p65 = pneg %p59
    %p66 = scmp.eq.s32.totalorder %s12, 7
    %p67 = por %p65, %p66
    %p68 = scmp.ne.s32.totalorder %s60, %s63
    %p69 = scmp.eq.s32.totalorder %s12, 0
    %p70 = por %p68, %p69
    %p71 = scmp.ne.s32.totalorder %s60, %s63
    %p72 = scmp.eq.s32.totalorder %s17, 7
    %p73 = por %p71, %p72
    %p74 = scmp.ne.s32.totalorder %s63, %s64
    %p75 = scmp.eq.s32.totalorder %s17, 0
    %p76 = por %p74, %p75
    %p77 = scmp.ne.s32.totalorder %s63, %s64
    %p78 = scmp.eq.s32.totalorder %s18, 7
    %p79 = por %p77, %p78
    %p81 = scmp.ne.s32.totalorder %s64, %s80
    %p82 = scmp.eq.s32.totalorder %s18, 0
    %p83 = por %p81, %p82
    %s84 = ssub.s32 %s20, %s27
    %p85 = scmp.eq.s32.totalorder %s84, 0
    %s87 = sadd.s32 %s86, 1
    %s88 = scalar_select %p85, %s86, %s87
    %p91 = pneg %p85
    %p92 = scmp.eq.s32.totalorder %s12, 7
    %p93 = por %p91, %p92
    %p94 = scmp.ne.s32.totalorder %s86, %s89
    %p95 = scmp.eq.s32.totalorder %s12, 0
    %p96 = por %p94, %p95
    %p97 = scmp.ne.s32.totalorder %s86, %s89
    %p98 = scmp.eq.s32.totalorder %s17, 7
    %p99 = por %p97, %p98
    %p100 = scmp.ne.s32.totalorder %s89, %s90
    %p101 = scmp.eq.s32.totalorder %s17, 0
    %p102 = por %p100, %p101
    %p103 = scmp.ne.s32.totalorder %s89, %s90
    %p104 = scmp.eq.s32.totalorder %s18, 7
    %p105 = por %p103, %p104
    %p107 = scmp.ne.s32.totalorder %s90, %s106
    %p108 = scmp.eq.s32.totalorder %s18, 0
    %p109 = por %p107, %p108
    %s110 = ssub.s32 %s19, %s31
    %s111 = ssub.s32 %s20, %s27
    %s112 = sor.u32 %s110, %s111
    %p113 = scmp.eq.s32.totalorder %s112, 0
    %s115 = sadd.s32 %s114, 1
    %s116 = scalar_select %p113, %s114, %s115
    %p119 = pneg %p113
    %p120 = scmp.eq.s32.totalorder %s12, 7
    %p121 = por %p119, %p120
    %p122 = scmp.ne.s32.totalorder %s114, %s117
    %p123 = scmp.eq.s32.totalorder %s12, 0
    %p124 = por %p122, %p123
    %p125 = scmp.ne.s32.totalorder %s114, %s117
    %p126 = scmp.eq.s32.totalorder %s17, 7
    %p127 = por %p125, %p126
    %p128 = scmp.ne.s32.totalorder %s117, %s118
    %p129 = scmp.eq.s32.totalorder %s17, 0
    %p130 = por %p128, %p129
    %p131 = scmp.ne.s32.totalorder %s117, %s118
    %p132 = scmp.eq.s32.totalorder %s18, 7
    %p133 = por %p131, %p132
    %p135 = scmp.ne.s32.totalorder %s118, %s134
    %p136 = scmp.eq.s32.totalorder %s18, 0
    %p137 = por %p135, %p136
    %s138 = ssub.s32 %s19, %s31
    %s139 = ssub.s32 %s20, %s27
    %s140 = sor.u32 %s138, %s139
    %p141 = scmp.eq.s32.totalorder %s140, 0
    %s143 = sadd.s32 %s142, 1
    %s144 = scalar_select %p141, %s142, %s143
    %p147 = pneg %p141
    %p148 = scmp.eq.s32.totalorder %s12, 7
    %p149 = por %p147, %p148
    %p150 = scmp.ne.s32.totalorder %s142, %s145
    %p151 = scmp.eq.s32.totalorder %s12, 0
    %p152 = por %p150, %p151
    %p153 = scmp.ne.s32.totalorder %s142, %s145
    %p154 = scmp.eq.s32.totalorder %s17, 7
    %p155 = por %p153, %p154
    %p156 = scmp.ne.s32.totalorder %s145, %s146
    %p157 = scmp.eq.s32.totalorder %s17, 0
    %p158 = por %p156, %p157
    %p159 = scmp.ne.s32.totalorder %s145, %s146
    %p160 = scmp.eq.s32.totalorder %s18, 7
    %p161 = por %p159, %p160
    %p163 = scmp.ne.s32.totalorder %s146, %s162
    %p164 = scmp.eq.s32.totalorder %s18, 0
    %p165 = por %p163, %p164
    %s166 = ssub.s32 %s19, %s31
    %s167 = ssub.s32 %s20, %s27
    %s168 = sor.u32 %s166, %s167
    %p169 = scmp.eq.s32.totalorder %s168, 0
    %s171 = sadd.s32 %s170, 1
    %s172 = scalar_select %p169, %s170, %s171
    %p175 = pneg %p169
    %p176 = scmp.eq.s32.totalorder %s12, 7
    %p177 = por %p175, %p176
    %p178 = scmp.ne.s32.totalorder %s170, %s173
    %p179 = scmp.eq.s32.totalorder %s12, 0
    %p180 = por %p178, %p179
    %p181 = scmp.ne.s32.totalorder %s170, %s173
    %p182 = scmp.eq.s32.totalorder %s17, 7
    %p183 = por %p181, %p182
    %p184 = scmp.ne.s32.totalorder %s173, %s174
    %p185 = scmp.eq.s32.totalorder %s17, 0
    %p186 = por %p184, %p185
    %p187 = scmp.ne.s32.totalorder %s173, %s174
    %p188 = scmp.eq.s32.totalorder %s18, 7
    %p189 = por %p187, %p188
    %p191 = scmp.ne.s32.totalorder %s174, %s190
    %p192 = scmp.eq.s32.totalorder %s18, 0
    %p193 = por %p191, %p192
    %p194 = scmp.le.s32.totalorder 1, %s12
    %p195 = scmp.lt.s32.totalorder %s12, 9
    %p196 = pnand %p194, %p195
    %p197 = pneg %p196
    // Predicated region
    $region9: #{tpu_custom_call.1} parent=5 // pred_check
      _
    $region10: #{tpu_custom_call.1} parent=5 // pred_check_branch
      %199 = sbr.rel (%p196) target = $region12
    $region11: #{tpu_custom_call.1} parent=5 // pred_region
      %s200 = ssub.s32 %s12, 1
    $region12: #{tpu_custom_call.1} parent=5 // pred_fallthru
      _
    %p201 = scmp.lt.s32.totalorder %s12, 8
    // Predicated region
    $region13: #{tpu_custom_call.1} parent=5 // pred_check
      %p202 = pneg %p201
    $region14: #{tpu_custom_call.1} parent=5 // pred_check_branch
      %204 = sbr.rel (%p202) target = $region16
    $region15: #{tpu_custom_call.1} parent=5 // pred_region
      // Predicated region
      $region17: #{tpu_custom_call.1} parent=15 // pred_check
        %p205 = pneg %p44
      $region18: #{tpu_custom_call.1} parent=15 // pred_check_branch
        %207 = sbr.rel (%p205) target = $region20
      $region19: #{tpu_custom_call.1} parent=15 // pred_region
        %p208 = scmp.lt.s32.totalorder %s19, 1
        %s209 = scalar_select %p208, %s19, 1
        %s210 = smul.addr %s209, 4
        %s211 = smul.addr %s210, 8
        %s212 = scalar_lea.vmem %s0, %s211
      $region20: #{tpu_custom_call.1} parent=15 // pred_fallthru
        _
      // Predicated region
      $region21: #{tpu_custom_call.1} parent=15 // pred_check
        %p213 = pneg %p70
      $region22: #{tpu_custom_call.1} parent=15 // pred_check_branch
        %215 = sbr.rel (%p213) target = $region24
      $region23: #{tpu_custom_call.1} parent=15 // pred_region
        %p216 = scmp.lt.s32.totalorder %s20, 3
        %s217 = scalar_select %p216, %s20, 3
        %s218 = smul.addr %s217, 4
        %s219 = smul.addr %s218, 4
        %s220 = scalar_lea.vmem %s1, %s219
      $region24: #{tpu_custom_call.1} parent=15 // pred_fallthru
        _
      // Predicated region
      $region25: #{tpu_custom_call.1} parent=15 // pred_check
        %p221 = pneg %p96
      $region26: #{tpu_custom_call.1} parent=15 // pred_check_branch
        %223 = sbr.rel (%p221) target = $region28
      $region27: #{tpu_custom_call.1} parent=15 // pred_region
        %p224 = scmp.lt.s32.totalorder %s20, 3
        %s225 = scalar_select %p224, %s20, 3
        %s226 = scalar_lea.vmem %s2, %s225
      $region28: #{tpu_custom_call.1} parent=15 // pred_fallthru
        _
    $region16: #{tpu_custom_call.1} parent=5 // pred_fallthru
      _
    %p227 = scmp.le.s32.totalorder 1, %s12
    %p228 = scmp.lt.s32.totalorder %s12, 9
    %p229 = pnand %p227, %p228
    %p230 = pneg %p229
    // Predicated region
    $region29: #{tpu_custom_call.1} parent=5 // pred_check
      _
    $region30: #{tpu_custom_call.1} parent=5 // pred_check_branch
      %232 = sbr.rel (%p229) target = $region32
    $region31: #{tpu_custom_call.1} parent=5 // pred_region
      %s233 = ssub.s32 %s12, 1
      %p234 = scmp.lt.s32.totalorder %s21, 1
      %s235 = scalar_select %p234, %s21, 1
      %s236 = smul.addr %s235, 4
      %s237 = smul.addr %s236, 8
      %s238 = scalar_lea.vmem %s0, %s237
      %p239 = pneg %p50
      %p240 = pneg %p47
      %p241 = scmp.lt.s32.totalorder %s22, 3
      %s242 = scalar_select %p241, %s22, 3
      %s243 = smul.addr %s242, 4
      %s244 = smul.addr %s243, 4
      %s245 = scalar_lea.vmem %s1, %s244
      %p246 = pneg %p76
      %p247 = pneg %p73
      %p248 = scmp.lt.s32.totalorder %s22, 3
      %s249 = scalar_select %p248, %s22, 3
      %s250 = scalar_lea.vmem %s2, %s249
      %p251 = pneg %p102
      %p252 = pneg %p99
      %p253 = pneg %p130
      %p254 = pneg %p127
      %p255 = scmp.lt.s32.totalorder %s21, 1
      %s256 = scalar_select %p255, %s21, 1
      %p257 = scmp.lt.s32.totalorder %s22, 3
      %s258 = scalar_select %p257, %s22, 3
      %s259 = smul.addr %s258, 4
      %s260 = smul.addr %s256, 16
      %s261 = sadd.s32 %s259, %s260
      %s262 = smul.addr %s261, 4
      %s263 = scalar_lea.vmem %s3, %s262
      %p264 = pneg %p158
      %p265 = pneg %p155
      %p266 = scmp.lt.s32.totalorder %s21, 1
      %s267 = scalar_select %p266, %s21, 1
      %p268 = scmp.lt.s32.totalorder %s22, 3
      %s269 = scalar_select %p268, %s22, 3
      %s270 = smul.addr %s269, 4
      %s271 = smul.addr %s267, 16
      %s272 = sadd.s32 %s270, %s271
      %s273 = smul.addr %s272, 4
      %s274 = scalar_lea.vmem %s4, %s273
      %p275 = pneg %p186
      %p276 = pneg %p183
      %p277 = scmp.lt.s32.totalorder %s21, 1
      %s278 = scalar_select %p277, %s21, 1
      %p279 = scmp.lt.s32.totalorder %s22, 3
      %s280 = scalar_select %p279, %s22, 3
      %s281 = smul.addr %s280, 4
      %s282 = smul.addr %s278, 16
      %s283 = sadd.s32 %s281, %s282
      %s284 = smul.addr %s283, 4
      %s285 = scalar_lea.vmem %s5, %s284
      %p286 = scmp.lt.s32.totalorder %s21, 1
      %s287 = scalar_select %p286, %s21, 1
      %s288 = smul.addr %s287, 4
      %s289 = smul.addr %s288, 8
      %s290 = scalar_lea.vmem %s0, %s289
      %p291 = scmp.lt.s32.totalorder %s22, 3
      %s292 = scalar_select %p291, %s22, 3
      %s293 = smul.addr %s292, 4
      %s294 = smul.addr %s293, 4
      %s295 = scalar_lea.vmem %s1, %s294
      %p296 = scmp.lt.s32.totalorder %s22, 3
      %s297 = scalar_select %p296, %s22, 3
      %s298 = scalar_lea.vmem %s2, %s297
      %p299 = scmp.lt.s32.totalorder %s21, 1
      %s300 = scalar_select %p299, %s21, 1
      %p301 = scmp.lt.s32.totalorder %s22, 3
      %s302 = scalar_select %p301, %s22, 3
      %s303 = smul.addr %s302, 4
      %s304 = smul.addr %s300, 16
      %s305 = sadd.s32 %s303, %s304
      %s306 = smul.addr %s305, 4
      %s307 = scalar_lea.vmem %s3, %s306
      %p308 = scmp.lt.s32.totalorder %s21, 1
      %s309 = scalar_select %p308, %s21, 1
      %p310 = scmp.lt.s32.totalorder %s22, 3
      %s311 = scalar_select %p310, %s22, 3
      %s312 = smul.addr %s311, 4
      %s313 = smul.addr %s309, 16
      %s314 = sadd.s32 %s312, %s313
      %s315 = smul.addr %s314, 4
      %s316 = scalar_lea.vmem %s4, %s315
      %p317 = scmp.lt.s32.totalorder %s21, 1
      %s318 = scalar_select %p317, %s21, 1
      %p319 = scmp.lt.s32.totalorder %s22, 3
      %s320 = scalar_select %p319, %s22, 3
      %s321 = smul.addr %s320, 4
      %s322 = smul.addr %s318, 16
      %s323 = sadd.s32 %s321, %s322
      %s324 = smul.addr %s323, 4
      %s325 = scalar_lea.vmem %s5, %s324
      %v327 = vld [vmem:[%s290] sm:$0xff]
      %v328 = vld [vmem:[%s290 + $0x8] sm:$0xff]
      %v329 = vld [vmem:[%s290 + $0x10] sm:$0xff]
      %v330 = vld [vmem:[%s290 + $0x18] sm:$0xff]
      %v331 = vpack.c.bf16 %v328, %v327
      %v332 = vpack.c.bf16 %v330, %v329
      %v333 = vld [vmem:[%s295] sm:$0xf]
      %v334 = vld [vmem:[%s295 + $0x4] sm:$0xf]
      %v335 = vld [vmem:[%s295 + $0x8] sm:$0xf]
      %v336 = vld [vmem:[%s295 + $0xc] sm:$0xf]
      %v337 = vld [vmem:[%s298] sm:$0x1]
      %v339 = vlaneseq
      %v340 = vshrl.u32 %v339, 7
      %v341 = vsub.s32 0, %v340
      %v342 = vrot.slane %v337, %v341
      %v348 = vunpack.c.l.b16 %v333
      %v349 = vunpack.c.l.b16 %v334
      %v350 = vunpack.c.l.b16 %v335
      %v351 = vunpack.c.l.b16 %v336
      %v352 = vpack.c.b16 %v349, %v348
      %v353 = vpack.c.b16 %v351, %v350
      %vm356 = vcmask 261120
      %v358 = vsel %vm356, %v331, 0
      %v361 = vsel %vm356, %v332, 0
      %363 = vmatprep.subr.bf16.mxu0 0
      %364 = vmatpush1.bf16.msra.mxu0 %v352
      %365 = vmatprep.subr.bf16.mxu0 0
      %366 = vmatpush1.bf16.msra.mxu0 %v353
      %367 = vmatprep.subr.bf16.mxu0 0
      %368 = vmatpush1.bf16.msra.mxu0 0
      %369 = vmatprep.subr.bf16.mxu0 0
      %370 = vmatpush1.bf16.msra.mxu0 0
      %371 = vmatprep.subr.bf16.mxu0 0
      %372 = vmatpush1.bf16.msra.mxu0 0
      %373 = vmatprep.subr.bf16.mxu0 0
      %374 = vmatpush1.bf16.msra.mxu0 0
      %375 = vmatprep.subr.bf16.mxu0 0
      %376 = vmatpush1.bf16.msra.mxu0 0
      %377 = vmatprep.subr.bf16.mxu0 0
      %378 = vmatpush1.bf16.msra.mxu0 0
      %379 = vmatprep.subr.bf16.mxu0 0
      %380 = vmatpush1.bf16.msra.mxu0 0
      %381 = vmatprep.subr.bf16.mxu0 0
      %382 = vmatpush1.bf16.msra.mxu0 0
      %383 = vmatprep.subr.bf16.mxu0 0
      %384 = vmatpush1.bf16.msra.mxu0 0
      %385 = vmatprep.subr.bf16.mxu0 0
      %386 = vmatpush1.bf16.msra.mxu0 0
      %387 = vmatprep.subr.bf16.mxu0 0
      %388 = vmatpush1.bf16.msra.mxu0 0
      %389 = vmatprep.subr.bf16.mxu0 0
      %390 = vmatpush1.bf16.msra.mxu0 0
      %391 = vmatprep.subr.bf16.mxu0 0
      %392 = vmatpush1.bf16.msra.mxu0 0
      %393 = vmatprep.subr.bf16.mxu0 0
      %394 = vmatpush1.bf16.msra.mxu0 0
      %395 = vmatprep.mubr.bf16.mxu0 0
      %396 = vmatmul.mubr.bf16.gmra.mrb[0].mxu0 %v358
      %v397 = vpop.f32.mrb[0].mxu0
      %v398 = vadd.f32 %v342, %v397
      %v399 = vpop.f32.mrb[0].mxu0
      %v400 = vpop.f32.mrb[0].mxu0
      %v401 = vadd.f32 %v342, %v400
      %v402 = vpop.f32.mrb[0].mxu0
      %403 = vmatprep.mubr.bf16.mxu0 0
      %404 = vmatmul.mubr.bf16.gmra.mrb[0].mxu0 %v361
      %v405 = vpop.f32.mrb[0].mxu0
      %v406 = vadd.f32 %v342, %v405
      %v407 = vpop.f32.mrb[0].mxu0
      %v408 = vpop.f32.mrb[0].mxu0
      %v409 = vadd.f32 %v342, %v408
      %v410 = vpop.f32.mrb[0].mxu0
      %411 = vdwg.mxu0
      %v412 = vpack.c.bf16 %v401, %v398
      %v413 = vpack.c.bf16 %v409, %v406
      %v416 = vunpack.c.l.b16 %v412
      %v417 = vunpack.c.h.b16 %v412
      %v418 = vunpack.c.l.b16 %v413
      %v419 = vunpack.c.h.b16 %v413
      %v420 = vpack.c.b16 %v416, %v416
      %v421 = vpack.c.b16 %v417, %v417
      %v422 = vpack.c.b16 %v418, %v418
      %v423 = vpack.c.b16 %v419, %v419
      %vm428 = vcmask 60416
      %429 = vst.msk [vmem:[%s307] sm:$0xf] %vm428, %v420
      %430 = vst.msk [vmem:[%s307 + $0x4] sm:$0xf] %vm428, %v421
      %431 = vst.msk [vmem:[%s307 + $0x8] sm:$0xf] %vm428, %v422
      %432 = vst.msk [vmem:[%s307 + $0xc] sm:$0xf] %vm428, %v423
      %433 = vrot.lane.b32.xlu0 %v420, 120
      %v434 = vpop.permute.xlu0 %433
      %435 = vrot.lane.b32.xlu0 %v421, 120
      %v436 = vpop.permute.xlu0 %435
      %437 = vrot.lane.b32.xlu0 %v422, 120
      %v438 = vpop.permute.xlu0 %437
      %439 = vrot.lane.b32.xlu0 %v423, 120
      %v440 = vpop.permute.xlu0 %439
      %445 = vst.msk [vmem:[%s316] sm:$0xf] %vm428, %v434
      %446 = vst.msk [vmem:[%s316 + $0x4] sm:$0xf] %vm428, %v436
      %447 = vst.msk [vmem:[%s316 + $0x8] sm:$0xf] %vm428, %v438
      %448 = vst.msk [vmem:[%s316 + $0xc] sm:$0xf] %vm428, %v440
      %449 = vrot.lane.b32.xlu0 %v420, 112
      %v450 = vpop.permute.xlu0 %449
      %451 = vrot.lane.b32.xlu0 %v421, 112
      %v452 = vpop.permute.xlu0 %451
      %453 = vrot.lane.b32.xlu0 %v422, 112
      %v454 = vpop.permute.xlu0 %453
      %455 = vrot.lane.b32.xlu0 %v423, 112
      %v456 = vpop.permute.xlu0 %455
      %461 = vst.msk [vmem:[%s325] sm:$0xf] %vm428, %v450
      %462 = vst.msk [vmem:[%s325 + $0x4] sm:$0xf] %vm428, %v452
      %463 = vst.msk [vmem:[%s325 + $0x8] sm:$0xf] %vm428, %v454
      %464 = vst.msk [vmem:[%s325 + $0xc] sm:$0xf] %vm428, %v456
      %p465 = scmp.lt.s32.totalorder %s21, 1
      %s466 = scalar_select %p465, %s21, 1
      %p467 = scmp.lt.s32.totalorder %s22, 3
      %s468 = scalar_select %p467, %s22, 3
      %s469 = smul.addr %s468, 4
      %s470 = smul.addr %s466, 16
      %s471 = sadd.s32 %s469, %s470
      %s472 = smul.addr %s471, 4
      %s473 = scalar_lea.vmem %s3, %s472
      %p474 = scmp.lt.s32.totalorder %s21, 1
      %s475 = scalar_select %p474, %s21, 1
      %p476 = scmp.lt.s32.totalorder %s22, 3
      %s477 = scalar_select %p476, %s22, 3
      %s478 = smul.addr %s477, 4
      %s479 = smul.addr %s475, 16
      %s480 = sadd.s32 %s478, %s479
      %s481 = smul.addr %s480, 4
      %s482 = scalar_lea.vmem %s4, %s481
      %p483 = scmp.lt.s32.totalorder %s21, 1
      %s484 = scalar_select %p483, %s21, 1
      %p485 = scmp.lt.s32.totalorder %s22, 3
      %s486 = scalar_select %p485, %s22, 3
      %s487 = smul.addr %s486, 4
      %s488 = smul.addr %s484, 16
      %s489 = sadd.s32 %s487, %s488
      %s490 = smul.addr %s489, 4
      %s491 = scalar_lea.vmem %s5, %s490
      // Predicated region
      $region33: #{tpu_custom_call.1} parent=31 // pred_check
        %p492 = pneg %p127
      $region34: #{tpu_custom_call.1} parent=31 // pred_check_branch
        %494 = sbr.rel (%p492) target = $region36
      $region35: #{tpu_custom_call.1} parent=31 // pred_region
        _
      $region36: #{tpu_custom_call.1} parent=31 // pred_fallthru
        _
      // Predicated region
      $region37: #{tpu_custom_call.1} parent=31 // pred_check
        %p495 = pneg %p155
      $region38: #{tpu_custom_call.1} parent=31 // pred_check_branch
        %497 = sbr.rel (%p495) target = $region40
      $region39: #{tpu_custom_call.1} parent=31 // pred_region
        _
      $region40: #{tpu_custom_call.1} parent=31 // pred_fallthru
        _
      // Predicated region
      $region41: #{tpu_custom_call.1} parent=31 // pred_check
        %p498 = pneg %p183
      $region42: #{tpu_custom_call.1} parent=31 // pred_check_branch
        %500 = sbr.rel (%p498) target = $region44
      $region43: #{tpu_custom_call.1} parent=31 // pred_region
        _
      $region44: #{tpu_custom_call.1} parent=31 // pred_fallthru
        _
    $region32: #{tpu_custom_call.1} parent=5 // pred_fallthru
      _
    %p501 = scmp.le.s32.totalorder 2, %s12
    // Predicated region
    $region45: #{tpu_custom_call.1} parent=5 // pred_check
      %p502 = pneg %p501
    $region46: #{tpu_custom_call.1} parent=5 // pred_check_branch
      %504 = sbr.rel (%p502) target = $region48
    $region47: #{tpu_custom_call.1} parent=5 // pred_region
      %s505 = ssub.s32 %s12, 2
      // Predicated region
      $region49: #{tpu_custom_call.1} parent=47 // pred_check
        %p506 = pneg %p133
      $region50: #{tpu_custom_call.1} parent=47 // pred_check_branch
        %508 = sbr.rel (%p506) target = $region52
      $region51: #{tpu_custom_call.1} parent=47 // pred_region
        %p509 = scmp.lt.s32.totalorder %s23, 1
        %s510 = scalar_select %p509, %s23, 1
        %p511 = scmp.lt.s32.totalorder %s24, 3
        %s512 = scalar_select %p511, %s24, 3
        %s513 = smul.addr %s512, 4
        %s514 = smul.addr %s510, 16
        %s515 = sadd.s32 %s513, %s514
        %s516 = smul.addr %s515, 4
        %s517 = scalar_lea.vmem %s3, %s516
      $region52: #{tpu_custom_call.1} parent=47 // pred_fallthru
        _
      // Predicated region
      $region53: #{tpu_custom_call.1} parent=47 // pred_check
        %p518 = pneg %p161
      $region54: #{tpu_custom_call.1} parent=47 // pred_check_branch
        %520 = sbr.rel (%p518) target = $region56
      $region55: #{tpu_custom_call.1} parent=47 // pred_region
        %p521 = scmp.lt.s32.totalorder %s23, 1
        %s522 = scalar_select %p521, %s23, 1
        %p523 = scmp.lt.s32.totalorder %s24, 3
        %s524 = scalar_select %p523, %s24, 3
        %s525 = smul.addr %s524, 4
        %s526 = smul.addr %s522, 16
        %s527 = sadd.s32 %s525, %s526
        %s528 = smul.addr %s527, 4
        %s529 = scalar_lea.vmem %s4, %s528
      $region56: #{tpu_custom_call.1} parent=47 // pred_fallthru
        _
      // Predicated region
      $region57: #{tpu_custom_call.1} parent=47 // pred_check
        %p530 = pneg %p189
      $region58: #{tpu_custom_call.1} parent=47 // pred_check_branch
        %532 = sbr.rel (%p530) target = $region60
      $region59: #{tpu_custom_call.1} parent=47 // pred_region
        %p533 = scmp.lt.s32.totalorder %s23, 1
        %s534 = scalar_select %p533, %s23, 1
        %p535 = scmp.lt.s32.totalorder %s24, 3
        %s536 = scalar_select %p535, %s24, 3
        %s537 = smul.addr %s536, 4
        %s538 = smul.addr %s534, 16
        %s539 = sadd.s32 %s537, %s538
        %s540 = smul.addr %s539, 4
        %s541 = scalar_lea.vmem %s5, %s540
      $region60: #{tpu_custom_call.1} parent=47 // pred_fallthru
        _
    $region48: #{tpu_custom_call.1} parent=5 // pred_fallthru
      _
  $region6: #{tpu_custom_call.1} parent=0 // loop_footer
    %s16 = sadd.s32 1, %s12
  $region7: #{tpu_custom_call.1} parent=0 // loop_footer_branch
    %11 = sbr.rel target = $region3
  $region8: #{tpu_custom_call.1} parent=0 // loop_exit
    _

</llo_original>
